<compile_context>
chip_gen: v7x
topology: tpu7x:2x2x1
jax: 0.10.0
libtpu: 0.0.40
codegen_flags: <defaults>
</compile_context>

<pallas_src>
import math

import jax
import jax.numpy as jnp
import numpy as np
from jax.experimental import pallas as pl
from jax.experimental.pallas import tpu as pltpu


def _adaptive_bins(in_size: int, out_size: int):
    """PyTorch AdaptiveAvgPool2d bin boundaries (exact semantics, static)."""
    return [
        (int(math.floor(i * in_size / out_size)),
         int(math.ceil((i + 1) * in_size / out_size)))
        for i in range(out_size)
    ]


def _pooling_matrix(H: int, W: int, S: int) -> np.ndarray:
    """(S*S, H*W) matrix whose row (sh*S+sw) averages the (sh, sw) adaptive bin."""
    h_bins = _adaptive_bins(H, S)
    w_bins = _adaptive_bins(W, S)
    m = np.zeros((S * S, H * W), dtype=np.float32)
    for sh, (hs, he) in enumerate(h_bins):
        for sw, (ws, we) in enumerate(w_bins):
            inv = 1.0 / float((he - hs) * (we - ws))
            for h in range(hs, he):
                m[sh * S + sw, h * W + ws:h * W + we] = inv
    return m


def _avg_pooler_kernel(x_ref, mt_ref, wt_ref, b_ref, o_ref):
    # x_ref:  (bt, C, H*W)      input batch chunk (input dtype)
    # mt_ref: (H*W, S*S) f32    pre-transposed pooling matrix (resident)
    # wt_ref: (C, hidden) f32   pre-transposed FC weight      (resident)
    # b_ref:  (1, hidden) f32   FC bias                       (resident)
    # o_ref:  (bt*S*S, hidden)  flattened, lane/sublane-dense output slab
    bt, C, P = x_ref.shape
    SS = mt_ref.shape[1]

    # (bt, C, P) -> (bt*C, P): leading-dim collapse, a layout no-op.
    x2 = x_ref[...].reshape(bt * C, P)
    if x2.dtype != jnp.float32:
        # Keep the pooling matmul in f32 so non-power-of-two 1/area weights
        # match the f32 PyTorch AdaptiveAvgPool2d (no-op for f32 inputs).
        x2 = x2.astype(jnp.float32)

    # Adaptive avg pool for the whole chunk: ONE MXU matmul, NN form.
    #   (bt*C, P) @ (P, S*S) -> (bt*C, S*S), f32 accumulation.
    pooled = jax.lax.dot_general(
        x2, mt_ref[...], (((1,), (0,)), ((), ())),
        preferred_element_type=jnp.float32)

    # Tiny rearrangement (b, c, s) -> (b, s, c): the only in-kernel relayout.
    seq = jnp.swapaxes(pooled.reshape(bt, C, SS), 1, 2).reshape(bt * SS, C)

    # fc1 (+ bias) for the whole chunk: ONE MXU matmul, NN form.
    #   (bt*S*S, C) @ (C, hidden) -> (bt*S*S, hidden), f32 accumulation.
    y = jax.lax.dot_general(
        seq, wt_ref[...], (((1,), (0,)), ((), ())),
        preferred_element_type=jnp.float32) + b_ref[...]

    o_ref[...] = jnp.maximum(y, 0.0).astype(o_ref.dtype)


def _vmem_plan():
    """Generation-aware (vmem_limit_bytes, batch-tile VMEM budget, min grid steps)."""
    kind = ""
    try:
        kind = jax.devices()[0].device_kind.lower()
    except Exception:
        pass
    if ("v7" in kind) or ("7x" in kind):
        # 64 MiB VMEM per TensorCore, 2 TCs/chip: conservative plan and keep
        # >= 2 'parallel' grid steps so megacore sharding feeds both cores.
        return 32 * 1024 * 1024, 8 * 1024 * 1024, 2
    if ("v6" in kind) or ("v5e" in kind) or ("lite" in kind):
        # 128 MiB VMEM, single TensorCore: big tiles, no forced grid split.
        return 64 * 1024 * 1024, 24 * 1024 * 1024, 1
    # Unknown / other generations: conservative defaults.
    return 32 * 1024 * 1024, 8 * 1024 * 1024, 2


def _pick_batch_tile(B, SS, per_b_bytes, const_bytes, budget_bytes, min_steps):
    """Largest per-step batch chunk fitting the VMEM budget; keeps the
    flattened output block 8-sublane aligned whenever the grid has > 1 step."""
    cap = max(1, int((budget_bytes - const_bytes) // max(per_b_bytes, 1)))
    if min_steps > 1 and B >= min_steps:
        cap = min(cap, -(-B // min_steps))      # leave >= min_steps grid steps
    cap = min(cap, B)
    if cap >= B:
        return B                                 # single step: block == full array
    align = 8 // math.gcd(8, SS)                 # need (bt*SS) % 8 == 0
    bt = (cap // align) * align
    if bt == 0:
        bt = min(align, B)
    return bt


def average_pooler(x_nchw, weight, bias, *, seq_red):
    """x_nchw: (B, C, H, W); weight: (hidden, c_dim); bias: (hidden,)."""
    B, C, H, W = x_nchw.shape
    hidden, c_dim = weight.shape
    assert c_dim == C, "c_dim must equal the channel dimension"
    S = seq_red
    SS = S * S
    P = H * W

    # Free reshape only (no extra HBM pass): (B, C, H, W) -> (B, C, H*W).
    x_flat = x_nchw.reshape(B, C, P)

    # Host-side constant prep (free): f32, pre-transposed for NN MXU dots.
    mt = jnp.asarray(_pooling_matrix(H, W, S).T, dtype=jnp.float32)   # (P, SS)
    wt = jnp.asarray(weight, dtype=jnp.float32).T                     # (C, hidden)
    b2 = jnp.asarray(bias, dtype=jnp.float32).reshape(1, hidden)

    # VMEM accounting per batch element (double-buffered tiles + intermediates).
    in_item = jnp.dtype(x_nchw.dtype).itemsize
    lane = 128
    per_b = (2 * C * P * in_item                      # double-buffered input tile
             + 2 * SS * hidden * in_item              # double-buffered output tile
             + C * max(SS, lane) * 4                  # lane-padded pooled intermediate
             + ((SS + 7) // 8) * 8 * C * 4)           # rearranged seq intermediate
    if in_item != 4:
        per_b += C * P * 4                            # in-kernel f32 upcast copy
    const_bytes = 2 * (max(SS, lane) * P + C * hidden + 8 * hidden) * 4

    vmem_limit, budget, min_steps = _vmem_plan()
    bt = _pick_batch_tile(B, SS, per_b, const_bytes, budget, min_steps)
    grid_n = -(-B // bt)
    Bp = grid_n * bt
    if Bp != B:                                       # non-divisor B: pad, slice later
        x_flat = jnp.pad(x_flat, ((0, Bp - B), (0, 0), (0, 0)))

    out_flat = pl.pallas_call(
        _avg_pooler_kernel,
        out_shape=jax.ShapeDtypeStruct((Bp * SS, hidden), x_nchw.dtype),
        grid_spec=pltpu.PrefetchScalarGridSpec(
            num_scalar_prefetch=0,
            grid=(grid_n,),
            in_specs=[
                pl.BlockSpec((bt, C, P), lambda i: (i, 0, 0)),
                # Constant index_maps -> resident in VMEM, no per-step DMA.
                pl.BlockSpec((P, SS), lambda i: (0, 0)),
                pl.BlockSpec((C, hidden), lambda i: (0, 0)),
                pl.BlockSpec((1, hidden), lambda i: (0, 0)),
            ],
            # Flattened output: full unmasked (8,128) tiles, one contiguous
            # writeback DMA per grid step.
            out_specs=pl.BlockSpec((bt * SS, hidden), lambda i: (i, 0)),
        ),
        compiler_params=pltpu.CompilerParams(
            dimension_semantics=("parallel",),
            vmem_limit_bytes=vmem_limit),
    )(x_flat, mt, wt, b2)

    # Drop batch padding (if any) and restore (B, S*S, hidden) — both free.
    return out_flat[: B * SS].reshape(B, SS, hidden)


def _reference(x_nchw, weight, bias, *, seq_red):
    """Pure-JAX reference of the PyTorch forward (for verification)."""
    B, C, H, W = x_nchw.shape
    S = seq_red
    h_bins = _adaptive_bins(H, S)
    w_bins = _adaptive_bins(W, S)
    pooled = jnp.stack(
        [jnp.stack(
            [jnp.mean(x_nchw[:, :, hs:he, ws:we], axis=(2, 3)) for (ws, we) in w_bins],
            axis=-1)
         for (hs, he) in h_bins],
        axis=-2)                                             # (B, C, S, S)
    flat = pooled.reshape(B, C, S * S)                       # (B, C, S*S)
    seq = jnp.transpose(flat, (0, 2, 1))                     # (B, S*S, C)
    y = jnp.einsum("bsc,hc->bsh", seq, weight) + bias[None, None, :]
    return jnp.maximum(y, 0.0)


if __name__ == "__main__":
    # Module-default dims (c_dim=256, hidden_dim=128), small batch/spatial.
    B, C, H, W = 4, 256, 16, 16
    seq_red, hidden = 2, 128

    key = jax.random.PRNGKey(0)
    kx, kw, kb = jax.random.split(key, 3)
    x = jax.random.normal(kx, (B, C, H, W), dtype=jnp.float32)

    # PyTorch Linear param shapes: weight (hidden, c_dim), bias (hidden,).
    bound = 1.0 / math.sqrt(C)
    weight = jax.random.uniform(kw, (hidden, C), minval=-bound, maxval=bound,
                                dtype=jnp.float32)
    bias = jax.random.uniform(kb, (hidden,), minval=-bound, maxval=bound,
                              dtype=jnp.float32)

    out = average_pooler(x, weight, bias, seq_red=seq_red)
    out = jax.block_until_ready(out)

    ref = _reference(x, weight, bias, seq_red=seq_red)
    assert out.shape == (B, seq_red * seq_red, hidden), out.shape
    assert jnp.allclose(out, ref, atol=1e-4, rtol=1e-4), "mismatch vs reference"

    print("KERNEL_OK")
</pallas_src>

<mosaic_0001>
module attributes {stable_mosaic.version = 11 : i64} {
  func.func @_avg_pooler_kernel(%arg0: i32, %arg1: memref<2x256x256xf32, #tpu.memory_space<vmem>>, %arg2: memref<256x4xf32, #tpu.memory_space<vmem>>, %arg3: memref<256x128xf32, #tpu.memory_space<vmem>>, %arg4: memref<1x128xf32, #tpu.memory_space<vmem>>, %arg5: memref<8x128xf32, #tpu.memory_space<vmem>>) attributes {dimension_semantics = [#tpu.dimension_semantics<parallel>], iteration_bounds = array<i64: 2>, scalar_prefetch = 0 : i64, scratch_operands = 0 : i64, tpu.core_type = #tpu.core_type<tc>, window_params = [{transform_indices = @transform_0, window_bounds = array<i64: 2, 256, 256>}, {pipeline_mode = #tpu.pipeline_mode<synchronous>, transform_indices = @transform_1, window_bounds = array<i64: 256, 4>}, {pipeline_mode = #tpu.pipeline_mode<synchronous>, transform_indices = @transform_2, window_bounds = array<i64: 256, 128>}, {pipeline_mode = #tpu.pipeline_mode<synchronous>, transform_indices = @transform_3, window_bounds = array<i64: 1, 128>}, {transform_indices = @transform_4, window_bounds = array<i64: 8, 128>}]} {
    %c0 = arith.constant 0 : index
    %c0_0 = arith.constant 0 : index
    %c0_1 = arith.constant 0 : index
    %0 = vector.load %arg1[%c0, %c0_0, %c0_1] : memref<2x256x256xf32, #tpu.memory_space<vmem>>, vector<2x256x256xf32>
    %1 = vector.shape_cast %0 : vector<2x256x256xf32> to vector<512x256xf32>
    %c0_2 = arith.constant 0 : index
    %c0_3 = arith.constant 0 : index
    %2 = vector.load %arg2[%c0_2, %c0_3] : memref<256x4xf32, #tpu.memory_space<vmem>>, vector<256x4xf32>
    %cst = arith.constant dense<0.000000e+00> : vector<512x4xf32>
    %3 = tpu.matmul %1, %2, %cst {dimension_numbers = #tpu.dot_dimension_numbers<[1], [0], [0], [1], [0, 0, 1, 1], [], []>} : vector<512x256xf32>, vector<256x4xf32>, vector<512x4xf32> -> vector<512x4xf32>
    %4 = vector.shape_cast %3 : vector<512x4xf32> to vector<2x256x4xf32>
    %5 = tpu.transpose %4, [0, 2, 1] : vector<2x256x4xf32> -> vector<2x4x256xf32>
    %6 = vector.shape_cast %5 : vector<2x4x256xf32> to vector<8x256xf32>
    %c0_4 = arith.constant 0 : index
    %c0_5 = arith.constant 0 : index
    %7 = vector.load %arg3[%c0_4, %c0_5] : memref<256x128xf32, #tpu.memory_space<vmem>>, vector<256x128xf32>
    %cst_6 = arith.constant dense<0.000000e+00> : vector<8x128xf32>
    %8 = tpu.matmul %6, %7, %cst_6 {dimension_numbers = #tpu.dot_dimension_numbers<[1], [0], [0], [1], [0, 0, 1, 1], [], []>} : vector<8x256xf32>, vector<256x128xf32>, vector<8x128xf32> -> vector<8x128xf32>
    %c0_7 = arith.constant 0 : index
    %c0_8 = arith.constant 0 : index
    %9 = vector.load %arg4[%c0_7, %c0_8] : memref<1x128xf32, #tpu.memory_space<vmem>>, vector<1x128xf32>
    %10 = vector.broadcast %9 : vector<1x128xf32> to vector<8x128xf32>
    %11 = arith.addf %8, %10 : vector<8x128xf32>
    %cst_9 = arith.constant 0.000000e+00 : f32
    %12 = vector.broadcast %cst_9 : f32 to vector<8x128xf32>
    %13 = arith.maximumf %11, %12 : vector<8x128xf32>
    %c0_10 = arith.constant 0 : index
    %c0_11 = arith.constant 0 : index
    %14 = vector.load %arg5[%c0_10, %c0_11] : memref<8x128xf32, #tpu.memory_space<vmem>>, vector<8x128xf32>
    tpu.vector_store %arg5[%c0_10, %c0_11], %13 {strides = array<i32>} : memref<8x128xf32, #tpu.memory_space<vmem>>, vector<8x128xf32>,
    return
  }
  func.func @transform_0(%arg0: i32) -> (i32, i32, i32) {
    %c0_i32 = arith.constant 0 : i32
    %c0_i32_0 = arith.constant 0 : i32
    %c0_i32_1 = arith.constant 0 : i32
    return %arg0, %c0_i32, %c0_i32_0 : i32, i32, i32
  }
  func.func @transform_1(%arg0: i32) -> (i32, i32) {
    %c0_i32 = arith.constant 0 : i32
    %c0_i32_0 = arith.constant 0 : i32
    %c0_i32_1 = arith.constant 0 : i32
    return %c0_i32, %c0_i32_0 : i32, i32
  }
  func.func @transform_2(%arg0: i32) -> (i32, i32) {
    %c0_i32 = arith.constant 0 : i32
    %c0_i32_0 = arith.constant 0 : i32
    %c0_i32_1 = arith.constant 0 : i32
    return %c0_i32, %c0_i32_0 : i32, i32
  }
  func.func @transform_3(%arg0: i32) -> (i32, i32) {
    %c0_i32 = arith.constant 0 : i32
    %c0_i32_0 = arith.constant 0 : i32
    %c0_i32_1 = arith.constant 0 : i32
    return %c0_i32, %c0_i32_0 : i32, i32
  }
  func.func @transform_4(%arg0: i32) -> (i32, i32) {
    %c0_i32 = arith.constant 0 : i32
    %c0_i32_0 = arith.constant 0 : i32
    return %arg0, %c0_i32 : i32, i32
  }
}

</mosaic_0001>

<llo_original>
// kernel: tpu_custom_call.1
$region0: #{tpu_custom_call.1}
  #allocation0 [shape = 'u32[]', space=smem, size = 0x4, offset = 0x4, fixed_abs, tag = 'smem constant byte address 0x4 - core index']
  #allocation1 [shape = 'u32[144,128]{1,0:T(1,128)}', space=vmem, size = 0x12000, scoped, tag = 'internal scratch']
  %s0 = inlined_call_operand.hbm [shape: f32[4,256,256], index: 0, kind: input, shape index: {}]
  %s1 = inlined_call_operand.vmem [shape: f32[256,4], index: 1, kind: input, shape index: {}]
  %s2 = inlined_call_operand.vmem [shape: f32[256,128], index: 2, kind: input, shape index: {}]
  %s3 = inlined_call_operand.vmem [shape: f32[1,128], index: 3, kind: input, shape index: {}]
  %s4 = inlined_call_operand.hbm [shape: f32[16,128], index: 4, kind: output, shape index: {}]
  %s5 = sld [smem:[#allocation0]]
  $region53: #{tpu_custom_call.1} parent=0
    _
  %s7 = ssub.s32 1, %s5
  %s8 = scalar_select 0, %s7, %s5
  $region1: #{tpu_custom_call.1} parent=0
    #allocation2 [shape = 'u8[1048576]{0}', space=vmem, size = 0x100000, scoped, tag = 'input window, operand 0']
    #allocation3 [shape = 's32[2]{0}', space=sflag, size = 0x8, scoped, tag = 'scoped memory for tpu_custom_call.1']
    #allocation4 [shape = 's32[2]{0}', space=sflag, size = 0x8, scoped, tag = 'scoped memory for tpu_custom_call.1']
    #allocation5 [shape = 'u8[8192]{0}', space=vmem, size = 0x2000, scoped, tag = 'output window, operand 0']
    %9 = vsyncpa [#allocation3], 0
    %s10 = scalar_lea.sflag [#allocation3], 1
    %11 = vsyncpa %s10, 0
    %12 = vsyncpa [#allocation4], 0
    %s13 = scalar_lea.sflag [#allocation4], 1
    %14 = vsyncpa %s13, 0
    loop: start=0, step=1, limit=4
    $region2: #{tpu_custom_call.1} parent=1 // loop_pre_header
      _
    $region3: #{tpu_custom_call.1} parent=1 // loop_header
      %s16 = sphi 0, %s20
      %p17 = scmp.ge.s32.totalorder %s16, 4
      %s26 = sphi 0, %s28
      %s29 = sphi 0, %s26
      %s30 = sphi 0, %s29
      %s46 = sphi 0, %s30
      %s50 = sphi 0, %s50
      %s52 = sphi 0, %s50
      %s53 = sphi 0, %s52
      %s67 = sphi 0, %s53
      %s71 = sphi 0, %s71
      %s73 = sphi 0, %s71
      %s74 = sphi 0, %s73
      %s88 = sphi 0, %s74
      %s92 = sphi 0, %s92
      %s94 = sphi 0, %s92
      %s95 = sphi 0, %s94
      %s109 = sphi 0, %s95
      %s115 = sphi 0, %s117
      %s118 = sphi 0, %s115
      %s119 = sphi 0, %s118
      %s135 = sphi 0, %s119
    $region4: #{tpu_custom_call.1} parent=1 // loop_header_branch
      %19 = sbr.rel (%p17) target = $region8
    $region5: #{tpu_custom_call.1} parent=1 // loop_body
      %s21 = ssub.s32 %s16, 1
      %s22 = ssub.s32 %s16, 2
      %s23 = sadd.s32 %s16, 1
      %s24 = ssub.s32 %s16, %s23
      %p25 = scmp.eq.s32.totalorder %s24, 0
      %s27 = sadd.s32 %s26, 1
      %s28 = scalar_select %p25, %s26, %s27
      %p31 = pneg %p25
      %p32 = scmp.eq.s32.totalorder %s16, 1
      %p33 = por %p31, %p32
      %p34 = scmp.ne.s32.totalorder %s26, %s29
      %p35 = scmp.eq.s32.totalorder %s16, 0
      %p36 = por %p34, %p35
      %p37 = scmp.ne.s32.totalorder %s26, %s29
      %p38 = scmp.eq.s32.totalorder %s21, 1
      %p39 = por %p37, %p38
      %p40 = scmp.ne.s32.totalorder %s29, %s30
      %p41 = scmp.eq.s32.totalorder %s21, 0
      %p42 = por %p40, %p41
      %p43 = scmp.ne.s32.totalorder %s29, %s30
      %p44 = scmp.eq.s32.totalorder %s22, 1
      %p45 = por %p43, %p44
      %p47 = scmp.ne.s32.totalorder %s30, %s46
      %p48 = scmp.eq.s32.totalorder %s22, 0
      %p49 = por %p47, %p48
      %s51 = sadd.s32 %s50, 1
      %p54 = scmp.eq.s32.totalorder %s16, 1
      %p55 = scmp.ne.s32.totalorder %s50, %s52
      %p56 = scmp.eq.s32.totalorder %s16, 0
      %p57 = por %p55, %p56
      %p58 = scmp.ne.s32.totalorder %s50, %s52
      %p59 = scmp.eq.s32.totalorder %s21, 1
      %p60 = por %p58, %p59
      %p61 = scmp.ne.s32.totalorder %s52, %s53
      %p62 = scmp.eq.s32.totalorder %s21, 0
      %p63 = por %p61, %p62
      %p64 = scmp.ne.s32.totalorder %s52, %s53
      %p65 = scmp.eq.s32.totalorder %s22, 1
      %p66 = por %p64, %p65
      %p68 = scmp.ne.s32.totalorder %s53, %s67
      %p69 = scmp.eq.s32.totalorder %s22, 0
      %p70 = por %p68, %p69
      %s72 = sadd.s32 %s71, 1
      %p75 = scmp.eq.s32.totalorder %s16, 1
      %p76 = scmp.ne.s32.totalorder %s71, %s73
      %p77 = scmp.eq.s32.totalorder %s16, 0
      %p78 = por %p76, %p77
      %p79 = scmp.ne.s32.totalorder %s71, %s73
      %p80 = scmp.eq.s32.totalorder %s21, 1
      %p81 = por %p79, %p80
      %p82 = scmp.ne.s32.totalorder %s73, %s74
      %p83 = scmp.eq.s32.totalorder %s21, 0
      %p84 = por %p82, %p83
      %p85 = scmp.ne.s32.totalorder %s73, %s74
      %p86 = scmp.eq.s32.totalorder %s22, 1
      %p87 = por %p85, %p86
      %p89 = scmp.ne.s32.totalorder %s74, %s88
      %p90 = scmp.eq.s32.totalorder %s22, 0
      %p91 = por %p89, %p90
      %s93 = sadd.s32 %s92, 1
      %p96 = scmp.eq.s32.totalorder %s16, 1
      %p97 = scmp.ne.s32.totalorder %s92, %s94
      %p98 = scmp.eq.s32.totalorder %s16, 0
      %p99 = por %p97, %p98
      %p100 = scmp.ne.s32.totalorder %s92, %s94
      %p101 = scmp.eq.s32.totalorder %s21, 1
      %p102 = por %p100, %p101
      %p103 = scmp.ne.s32.totalorder %s94, %s95
      %p104 = scmp.eq.s32.totalorder %s21, 0
      %p105 = por %p103, %p104
      %p106 = scmp.ne.s32.totalorder %s94, %s95
      %p107 = scmp.eq.s32.totalorder %s22, 1
      %p108 = por %p106, %p107
      %p110 = scmp.ne.s32.totalorder %s95, %s109
      %p111 = scmp.eq.s32.totalorder %s22, 0
      %p112 = por %p110, %p111
      %s113 = ssub.s32 %s16, %s23
      %p114 = scmp.eq.s32.totalorder %s113, 0
      %s116 = sadd.s32 %s115, 1
      %s117 = scalar_select %p114, %s115, %s116
      %p120 = pneg %p114
      %p121 = scmp.eq.s32.totalorder %s16, 1
      %p122 = por %p120, %p121
      %p123 = scmp.ne.s32.totalorder %s115, %s118
      %p124 = scmp.eq.s32.totalorder %s16, 0
      %p125 = por %p123, %p124
      %p126 = scmp.ne.s32.totalorder %s115, %s118
      %p127 = scmp.eq.s32.totalorder %s21, 1
      %p128 = por %p126, %p127
      %p129 = scmp.ne.s32.totalorder %s118, %s119
      %p130 = scmp.eq.s32.totalorder %s21, 0
      %p131 = por %p129, %p130
      %p132 = scmp.ne.s32.totalorder %s118, %s119
      %p133 = scmp.eq.s32.totalorder %s22, 1
      %p134 = por %p132, %p133
      %p136 = scmp.ne.s32.totalorder %s119, %s135
      %p137 = scmp.eq.s32.totalorder %s22, 0
      %p138 = por %p136, %p137
      %p139 = scmp.le.s32.totalorder 1, %s16
      %p140 = scmp.lt.s32.totalorder %s16, 3
      %p141 = pnand %p139, %p140
      %p142 = pneg %p141
      // Predicated region
      $region9: #{tpu_custom_call.1} parent=5 // pred_check
        _
      $region10: #{tpu_custom_call.1} parent=5 // pred_check_branch
        %144 = sbr.rel (%p141) target = $region12
      $region11: #{tpu_custom_call.1} parent=5 // pred_region
        %s145 = ssub.s32 %s16, 1
        // Predicated region
        $region13: #{tpu_custom_call.1} parent=11 // pred_check
          %p146 = pneg %p63
        $region14: #{tpu_custom_call.1} parent=11 // pred_check_branch
          %148 = sbr.rel (%p146) target = $region16
        $region15: #{tpu_custom_call.1} parent=11 // pred_region
          _
        $region16: #{tpu_custom_call.1} parent=11 // pred_fallthru
          _
        // Predicated region
        $region17: #{tpu_custom_call.1} parent=11 // pred_check
          %p149 = pneg %p84
        $region18: #{tpu_custom_call.1} parent=11 // pred_check_branch
          %151 = sbr.rel (%p149) target = $region20
        $region19: #{tpu_custom_call.1} parent=11 // pred_region
          _
        $region20: #{tpu_custom_call.1} parent=11 // pred_fallthru
          _
        // Predicated region
        $region21: #{tpu_custom_call.1} parent=11 // pred_check
          %p152 = pneg %p105
        $region22: #{tpu_custom_call.1} parent=11 // pred_check_branch
          %154 = sbr.rel (%p152) target = $region24
        $region23: #{tpu_custom_call.1} parent=11 // pred_region
          _
        $region24: #{tpu_custom_call.1} parent=11 // pred_fallthru
          _
      $region12: #{tpu_custom_call.1} parent=5 // pred_fallthru
        _
      %p155 = scmp.lt.s32.totalorder %s16, 2
      // Predicated region
      $region25: #{tpu_custom_call.1} parent=5 // pred_check
        %p156 = pneg %p155
      $region26: #{tpu_custom_call.1} parent=5 // pred_check_branch
        %158 = sbr.rel (%p156) target = $region28
      $region27: #{tpu_custom_call.1} parent=5 // pred_region
        // Predicated region
        $region29: #{tpu_custom_call.1} parent=27 // pred_check
          %p159 = pneg %p36
        $region30: #{tpu_custom_call.1} parent=27 // pred_check_branch
          %161 = sbr.rel (%p159) target = $region32
        $region31: #{tpu_custom_call.1} parent=27 // pred_region
          %s162 = sand.u32 %s26, 1
          %s163 = scalar_lea.sflag [#allocation3], %s162
          %s164 = sand.u32 %s26, 1
          %s165 = smul.addr %s164, 1024
          %s166 = scalar_lea.vmem [#allocation2], %s165
          %s167 = smul.u32 2, %s16
          %s169 = ssub.s32 16384, 16384
          %170 = vsyncadd %s163, %s169
          %s171 = smul.addr %s167, 64
          %s172 = smul.addr %s171, 128
          %s173 = scalar_lea.hbm %s0, %s172
          %s174 = sshll.u32 %s166, 4
          %s175 = int_to_ptr.vmem [resolvable:$true] %s174
          %180 = dma.hbm_to_vmem [thread:$0]  %s173, 16384, %s175, %s163, 256, 256, 16
        $region32: #{tpu_custom_call.1} parent=27 // pred_fallthru
          _
      $region28: #{tpu_custom_call.1} parent=5 // pred_fallthru
        _
      %p181 = scmp.le.s32.totalorder 1, %s16
      %p182 = scmp.lt.s32.totalorder %s16, 3
      %p183 = pnand %p181, %p182
      %p184 = pneg %p183
      // Predicated region
      $region33: #{tpu_custom_call.1} parent=5 // pred_check
        _
      $region34: #{tpu_custom_call.1} parent=5 // pred_check_branch
        %186 = sbr.rel (%p183) target = $region36
      $region35: #{tpu_custom_call.1} parent=5 // pred_region
        %s187 = ssub.s32 %s16, 1
        %s188 = sand.u32 %s29, 1
        %s189 = scalar_lea.sflag [#allocation3], %s188
        %s190 = sand.u32 %s29, 1
        %s191 = smul.addr %s190, 1024
        %s192 = scalar_lea.vmem [#allocation2], %s191
        // Predicated region
        $region37: #{tpu_custom_call.1} parent=35 // pred_check
          %p193 = pneg %p42
        $region38: #{tpu_custom_call.1} parent=35 // pred_check_branch
          %195 = sbr.rel (%p193) target = $region40
        $region39: #{tpu_custom_call.1} parent=35 // pred_region
          %196 = dma.done %s189, 16384
        $region40: #{tpu_custom_call.1} parent=35 // pred_fallthru
          _
        %s197 = sand.u32 %s29, 1
        %s198 = scalar_lea.sflag [#allocation3], %s197
        %s199 = sand.u32 %s29, 1
        %s200 = smul.addr %s199, 1024
        %s201 = scalar_lea.vmem [#allocation2], %s200
        %p202 = pneg %p42
        %p203 = pneg %p39
        %p204 = pneg %p63
        %p205 = pneg %p60
        %p206 = pneg %p84
        %p207 = pneg %p81
        %p208 = pneg %p105
        %p209 = pneg %p102
        %p210 = pneg %p131
        %p211 = pneg %p128
        %s212 = sand.u32 %s118, 1
        %s213 = scalar_lea.sflag [#allocation4], %s212
        %s214 = sand.u32 %s118, 1
        %s215 = smul.addr %s214, 8
        %s216 = scalar_lea.vmem [#allocation5], %s215
        %s217 = smul.u32 2, %s21
        %v218 = vld [vmem:[%s192] sm:$0xff]
        %v219 = vld [vmem:[%s192 + $0x8] sm:$0xff]
        %v220 = vld [vmem:[%s192 + $0x10] sm:$0xff]
        %v221 = vld [vmem:[%s192 + $0x18] sm:$0xff]
        %v222 = vld [vmem:[%s192 + $0x20] sm:$0xff]
        %v223 = vld [vmem:[%s192 + $0x28] sm:$0xff]
        %v224 = vld [vmem:[%s192 + $0x30] sm:$0xff]
        %v225 = vld [vmem:[%s192 + $0x38] sm:$0xff]
        %v226 = vld [vmem:[%s192 + $0x40] sm:$0xff]
        %v227 = vld [vmem:[%s192 + $0x48] sm:$0xff]
        %v228 = vld [vmem:[%s192 + $0x50] sm:$0xff]
        %v229 = vld [vmem:[%s192 + $0x58] sm:$0xff]
        %v230 = vld [vmem:[%s192 + $0x60] sm:$0xff]
        %v231 = vld [vmem:[%s192 + $0x68] sm:$0xff]
        %v232 = vld [vmem:[%s192 + $0x70] sm:$0xff]
        %v233 = vld [vmem:[%s192 + $0x78] sm:$0xff]
        %v234 = vld [vmem:[%s192 + $0x80] sm:$0xff]
        %v235 = vld [vmem:[%s192 + $0x88] sm:$0xff]
        %v236 = vld [vmem:[%s192 + $0x90] sm:$0xff]
        %v237 = vld [vmem:[%s192 + $0x98] sm:$0xff]
        %v238 = vld [vmem:[%s192 + $0xa0] sm:$0xff]
        %v239 = vld [vmem:[%s192 + $0xa8] sm:$0xff]
        %v240 = vld [vmem:[%s192 + $0xb0] sm:$0xff]
        %v241 = vld [vmem:[%s192 + $0xb8] sm:$0xff]
        %v242 = vld [vmem:[%s192 + $0xc0] sm:$0xff]
        %v243 = vld [vmem:[%s192 + $0xc8] sm:$0xff]
        %v244 = vld [vmem:[%s192 + $0xd0] sm:$0xff]
        %v245 = vld [vmem:[%s192 + $0xd8] sm:$0xff]
        %v246 = vld [vmem:[%s192 + $0xe0] sm:$0xff]
        %v247 = vld [vmem:[%s192 + $0xe8] sm:$0xff]
        %v248 = vld [vmem:[%s192 + $0xf0] sm:$0xff]
        %v249 = vld [vmem:[%s192 + $0xf8] sm:$0xff]
        %v250 = vld [vmem:[%s192 + $0x100] sm:$0xff]
        %v251 = vld [vmem:[%s192 + $0x108] sm:$0xff]
        %v252 = vld [vmem:[%s192 + $0x110] sm:$0xff]
        %v253 = vld [vmem:[%s192 + $0x118] sm:$0xff]
        %v254 = vld [vmem:[%s192 + $0x120] sm:$0xff]
        %v255 = vld [vmem:[%s192 + $0x128] sm:$0xff]
        %v256 = vld [vmem:[%s192 + $0x130] sm:$0xff]
        %v257 = vld [vmem:[%s192 + $0x138] sm:$0xff]
        %v258 = vld [vmem:[%s192 + $0x140] sm:$0xff]
        %v259 = vld [vmem:[%s192 + $0x148] sm:$0xff]
        %v260 = vld [vmem:[%s192 + $0x150] sm:$0xff]
        %v261 = vld [vmem:[%s192 + $0x158] sm:$0xff]
        %v262 = vld [vmem:[%s192 + $0x160] sm:$0xff]
        %v263 = vld [vmem:[%s192 + $0x168] sm:$0xff]
        %v264 = vld [vmem:[%s192 + $0x170] sm:$0xff]
        %v265 = vld [vmem:[%s192 + $0x178] sm:$0xff]
        %v266 = vld [vmem:[%s192 + $0x180] sm:$0xff]
        %v267 = vld [vmem:[%s192 + $0x188] sm:$0xff]
        %v268 = vld [vmem:[%s192 + $0x190] sm:$0xff]
        %v269 = vld [vmem:[%s192 + $0x198] sm:$0xff]
        %v270 = vld [vmem:[%s192 + $0x1a0] sm:$0xff]
        %v271 = vld [vmem:[%s192 + $0x1a8] sm:$0xff]
        %v272 = vld [vmem:[%s192 + $0x1b0] sm:$0xff]
        %v273 = vld [vmem:[%s192 + $0x1b8] sm:$0xff]
        %v274 = vld [vmem:[%s192 + $0x1c0] sm:$0xff]
        %v275 = vld [vmem:[%s192 + $0x1c8] sm:$0xff]
        %v276 = vld [vmem:[%s192 + $0x1d0] sm:$0xff]
        %v277 = vld [vmem:[%s192 + $0x1d8] sm:$0xff]
        %v278 = vld [vmem:[%s192 + $0x1e0] sm:$0xff]
        %v279 = vld [vmem:[%s192 + $0x1e8] sm:$0xff]
        %v280 = vld [vmem:[%s192 + $0x1f0] sm:$0xff]
        %v281 = vld [vmem:[%s192 + $0x1f8] sm:$0xff]
        %v282 = vld [vmem:[%s192 + $0x200] sm:$0xff]
        %v283 = vld [vmem:[%s192 + $0x208] sm:$0xff]
        %v284 = vld [vmem:[%s192 + $0x210] sm:$0xff]
        %v285 = vld [vmem:[%s192 + $0x218] sm:$0xff]
        %v286 = vld [vmem:[%s192 + $0x220] sm:$0xff]
        %v287 = vld [vmem:[%s192 + $0x228] sm:$0xff]
        %v288 = vld [vmem:[%s192 + $0x230] sm:$0xff]
        %v289 = vld [vmem:[%s192 + $0x238] sm:$0xff]
        %v290 = vld [vmem:[%s192 + $0x240] sm:$0xff]
        %v291 = vld [vmem:[%s192 + $0x248] sm:$0xff]
        %v292 = vld [vmem:[%s192 + $0x250] sm:$0xff]
        %v293 = vld [vmem:[%s192 + $0x258] sm:$0xff]
        %v294 = vld [vmem:[%s192 + $0x260] sm:$0xff]
        %v295 = vld [vmem:[%s192 + $0x268] sm:$0xff]
        %v296 = vld [vmem:[%s192 + $0x270] sm:$0xff]
        %v297 = vld [vmem:[%s192 + $0x278] sm:$0xff]
        %v298 = vld [vmem:[%s192 + $0x280] sm:$0xff]
        %v299 = vld [vmem:[%s192 + $0x288] sm:$0xff]
        %v300 = vld [vmem:[%s192 + $0x290] sm:$0xff]
        %v301 = vld [vmem:[%s192 + $0x298] sm:$0xff]
        %v302 = vld [vmem:[%s192 + $0x2a0] sm:$0xff]
        %v303 = vld [vmem:[%s192 + $0x2a8] sm:$0xff]
        %v304 = vld [vmem:[%s192 + $0x2b0] sm:$0xff]
        %v305 = vld [vmem:[%s192 + $0x2b8] sm:$0xff]
        %v306 = vld [vmem:[%s192 + $0x2c0] sm:$0xff]
        %v307 = vld [vmem:[%s192 + $0x2c8] sm:$0xff]
        %v308 = vld [vmem:[%s192 + $0x2d0] sm:$0xff]
        %v309 = vld [vmem:[%s192 + $0x2d8] sm:$0xff]
        %v310 = vld [vmem:[%s192 + $0x2e0] sm:$0xff]
        %v311 = vld [vmem:[%s192 + $0x2e8] sm:$0xff]
        %v312 = vld [vmem:[%s192 + $0x2f0] sm:$0xff]
        %v313 = vld [vmem:[%s192 + $0x2f8] sm:$0xff]
        %v314 = vld [vmem:[%s192 + $0x300] sm:$0xff]
        %v315 = vld [vmem:[%s192 + $0x308] sm:$0xff]
        %v316 = vld [vmem:[%s192 + $0x310] sm:$0xff]
        %v317 = vld [vmem:[%s192 + $0x318] sm:$0xff]
        %v318 = vld [vmem:[%s192 + $0x320] sm:$0xff]
        %v319 = vld [vmem:[%s192 + $0x328] sm:$0xff]
        %v320 = vld [vmem:[%s192 + $0x330] sm:$0xff]
        %v321 = vld [vmem:[%s192 + $0x338] sm:$0xff]
        %v322 = vld [vmem:[%s192 + $0x340] sm:$0xff]
        %v323 = vld [vmem:[%s192 + $0x348] sm:$0xff]
        %v324 = vld [vmem:[%s192 + $0x350] sm:$0xff]
        %v325 = vld [vmem:[%s192 + $0x358] sm:$0xff]
        %v326 = vld [vmem:[%s192 + $0x360] sm:$0xff]
        %v327 = vld [vmem:[%s192 + $0x368] sm:$0xff]
        %v328 = vld [vmem:[%s192 + $0x370] sm:$0xff]
        %v329 = vld [vmem:[%s192 + $0x378] sm:$0xff]
        %v330 = vld [vmem:[%s192 + $0x380] sm:$0xff]
        %v331 = vld [vmem:[%s192 + $0x388] sm:$0xff]
        %v332 = vld [vmem:[%s192 + $0x390] sm:$0xff]
        %v333 = vld [vmem:[%s192 + $0x398] sm:$0xff]
        %v334 = vld [vmem:[%s192 + $0x3a0] sm:$0xff]
        %v335 = vld [vmem:[%s192 + $0x3a8] sm:$0xff]
        %v336 = vld [vmem:[%s192 + $0x3b0] sm:$0xff]
        %v337 = vld [vmem:[%s192 + $0x3b8] sm:$0xff]
        %v338 = vld [vmem:[%s192 + $0x3c0] sm:$0xff]
        %v339 = vld [vmem:[%s192 + $0x3c8] sm:$0xff]
        %v340 = vld [vmem:[%s192 + $0x3d0] sm:$0xff]
        %v341 = vld [vmem:[%s192 + $0x3d8] sm:$0xff]
        %v342 = vld [vmem:[%s192 + $0x3e0] sm:$0xff]
        %v343 = vld [vmem:[%s192 + $0x3e8] sm:$0xff]
        %v344 = vld [vmem:[%s192 + $0x3f0] sm:$0xff]
        %v345 = vld [vmem:[%s192 + $0x3f8] sm:$0xff]
        %v346 = vld [vmem:[%s1] sm:$0xff]
        %v347 = vld [vmem:[%s1 + $0x8] sm:$0xff]
        %v348 = vld [vmem:[%s1 + $0x10] sm:$0xff]
        %v349 = vld [vmem:[%s1 + $0x18] sm:$0xff]
        %v350 = vld [vmem:[%s1 + $0x20] sm:$0xff]
        %v351 = vld [vmem:[%s1 + $0x28] sm:$0xff]
        %v352 = vld [vmem:[%s1 + $0x30] sm:$0xff]
        %v353 = vld [vmem:[%s1 + $0x38] sm:$0xff]
        %v354 = vld [vmem:[%s1 + $0x40] sm:$0xff]
        %v355 = vld [vmem:[%s1 + $0x48] sm:$0xff]
        %v356 = vld [vmem:[%s1 + $0x50] sm:$0xff]
        %v357 = vld [vmem:[%s1 + $0x58] sm:$0xff]
        %v358 = vld [vmem:[%s1 + $0x60] sm:$0xff]
        %v359 = vld [vmem:[%s1 + $0x68] sm:$0xff]
        %v360 = vld [vmem:[%s1 + $0x70] sm:$0xff]
        %v361 = vld [vmem:[%s1 + $0x78] sm:$0xff]
        %v362 = vld [vmem:[%s1 + $0x80] sm:$0xff]
        %v363 = vld [vmem:[%s1 + $0x88] sm:$0xff]
        %v364 = vld [vmem:[%s1 + $0x90] sm:$0xff]
        %v365 = vld [vmem:[%s1 + $0x98] sm:$0xff]
        %v366 = vld [vmem:[%s1 + $0xa0] sm:$0xff]
        %v367 = vld [vmem:[%s1 + $0xa8] sm:$0xff]
        %v368 = vld [vmem:[%s1 + $0xb0] sm:$0xff]
        %v369 = vld [vmem:[%s1 + $0xb8] sm:$0xff]
        %v370 = vld [vmem:[%s1 + $0xc0] sm:$0xff]
        %v371 = vld [vmem:[%s1 + $0xc8] sm:$0xff]
        %v372 = vld [vmem:[%s1 + $0xd0] sm:$0xff]
        %v373 = vld [vmem:[%s1 + $0xd8] sm:$0xff]
        %v374 = vld [vmem:[%s1 + $0xe0] sm:$0xff]
        %v375 = vld [vmem:[%s1 + $0xe8] sm:$0xff]
        %v376 = vld [vmem:[%s1 + $0xf0] sm:$0xff]
        %v377 = vld [vmem:[%s1 + $0xf8] sm:$0xff]
        %378 = vmatprep.subr.mxu0 0.0
        %379 = vmatpush1.msra.mxu0 %v346
        %380 = vmatprep.subr.mxu0 0.0
        %381 = vmatpush1.msra.mxu0 %v347
        %382 = vmatprep.subr.mxu0 0.0
        %383 = vmatpush1.msra.mxu0 %v348
        %384 = vmatprep.subr.mxu0 0.0
        %385 = vmatpush1.msra.mxu0 %v349
        %386 = vmatprep.subr.mxu0 0.0
        %387 = vmatpush1.msra.mxu0 %v350
        %388 = vmatprep.subr.mxu0 0.0
        %389 = vmatpush1.msra.mxu0 %v351
        %390 = vmatprep.subr.mxu0 0.0
        %391 = vmatpush1.msra.mxu0 %v352
        %392 = vmatprep.subr.mxu0 0.0
        %393 = vmatpush1.msra.mxu0 %v353
        %394 = vmatprep.subr.mxu0 0.0
        %395 = vmatpush1.msra.mxu0 %v354
        %396 = vmatprep.subr.mxu0 0.0
        %397 = vmatpush1.msra.mxu0 %v355
        %398 = vmatprep.subr.mxu0 0.0
        %399 = vmatpush1.msra.mxu0 %v356
        %400 = vmatprep.subr.mxu0 0.0
        %401 = vmatpush1.msra.mxu0 %v357
        %402 = vmatprep.subr.mxu0 0.0
        %403 = vmatpush1.msra.mxu0 %v358
        %404 = vmatprep.subr.mxu0 0.0
        %405 = vmatpush1.msra.mxu0 %v359
        %406 = vmatprep.subr.mxu0 0.0
        %407 = vmatpush1.msra.mxu0 %v360
        %408 = vmatprep.subr.mxu0 0.0
        %409 = vmatpush1.msra.mxu0 %v361
        %410 = vmatprep.subr.mxu0 0.0
        %411 = vmatpush1.msra.mxu0 %v362
        %412 = vmatprep.subr.mxu0 0.0
        %413 = vmatpush1.msra.mxu0 %v363
        %414 = vmatprep.subr.mxu0 0.0
        %415 = vmatpush1.msra.mxu0 %v364
        %416 = vmatprep.subr.mxu0 0.0
        %417 = vmatpush1.msra.mxu0 %v365
        %418 = vmatprep.subr.mxu0 0.0
        %419 = vmatpush1.msra.mxu0 %v366
        %420 = vmatprep.subr.mxu0 0.0
        %421 = vmatpush1.msra.mxu0 %v367
        %422 = vmatprep.subr.mxu0 0.0
        %423 = vmatpush1.msra.mxu0 %v368
        %424 = vmatprep.subr.mxu0 0.0
        %425 = vmatpush1.msra.mxu0 %v369
        %426 = vmatprep.subr.mxu0 0.0
        %427 = vmatpush1.msra.mxu0 %v370
        %428 = vmatprep.subr.mxu0 0.0
        %429 = vmatpush1.msra.mxu0 %v371
        %430 = vmatprep.subr.mxu0 0.0
        %431 = vmatpush1.msra.mxu0 %v372
        %432 = vmatprep.subr.mxu0 0.0
        %433 = vmatpush1.msra.mxu0 %v373
        %434 = vmatprep.subr.mxu0 0.0
        %435 = vmatpush1.msra.mxu0 %v374
        %436 = vmatprep.subr.mxu0 0.0
        %437 = vmatpush1.msra.mxu0 %v375
        %438 = vmatprep.subr.mxu0 0.0
        %439 = vmatpush1.msra.mxu0 %v376
        %440 = vmatprep.subr.mxu0 0.0
        %441 = vmatpush1.msra.mxu0 %v377
        %442 = vmatprep.mubr.f32.mxu0 %v219
        %443 = vmatmul.mubr.f32.gmra.mrb[0].mxu0 %v218
        %v444 = vpop.f32.mrb[0].mxu0
        %v445 = vadd.f32 0.0, %v444
        %v446 = vpop.f32.mrb[0].mxu0
        %447 = vmatprep.mubr.f32.mxu0 %v221
        %448 = vmatmul.mubr.f32.gmra.mrb[0].mxu0 %v220
        %v449 = vpop.f32.mrb[0].mxu0
        %v450 = vadd.f32 0.0, %v449
        %v451 = vpop.f32.mrb[0].mxu0
        %452 = vmatprep.mubr.f32.mxu0 %v223
        %453 = vmatmul.mubr.f32.gmra.mrb[0].mxu0 %v222
        %v454 = vpop.f32.mrb[0].mxu0
        %v455 = vadd.f32 0.0, %v454
        %v456 = vpop.f32.mrb[0].mxu0
        %457 = vmatprep.mubr.f32.mxu0 %v225
        %458 = vmatmul.mubr.f32.gmra.mrb[0].mxu0 %v224
        %v459 = vpop.f32.mrb[0].mxu0
        %v460 = vadd.f32 0.0, %v459
        %v461 = vpop.f32.mrb[0].mxu0
        %462 = vmatprep.mubr.f32.mxu0 %v227
        %463 = vmatmul.mubr.f32.gmra.mrb[0].mxu0 %v226
        %v464 = vpop.f32.mrb[0].mxu0
        %v465 = vadd.f32 0.0, %v464
        %v466 = vpop.f32.mrb[0].mxu0
        %467 = vmatprep.mubr.f32.mxu0 %v229
        %468 = vmatmul.mubr.f32.gmra.mrb[0].mxu0 %v228
        %v469 = vpop.f32.mrb[0].mxu0
        %v470 = vadd.f32 0.0, %v469
        %v471 = vpop.f32.mrb[0].mxu0
        %472 = vmatprep.mubr.f32.mxu0 %v231
        %473 = vmatmul.mubr.f32.gmra.mrb[0].mxu0 %v230
        %v474 = vpop.f32.mrb[0].mxu0
        %v475 = vadd.f32 0.0, %v474
        %v476 = vpop.f32.mrb[0].mxu0
        %477 = vmatprep.mubr.f32.mxu0 %v233
        %478 = vmatmul.mubr.f32.gmra.mrb[0].mxu0 %v232
        %v479 = vpop.f32.mrb[0].mxu0
        %v480 = vadd.f32 0.0, %v479
        %v481 = vpop.f32.mrb[0].mxu0
        %482 = vmatprep.mubr.f32.mxu0 %v235
        %483 = vmatmul.mubr.f32.gmra.mrb[0].mxu0 %v234
        %v484 = vpop.f32.mrb[0].mxu0
        %v485 = vadd.f32 0.0, %v484
        %v486 = vpop.f32.mrb[0].mxu0
        %487 = vmatprep.mubr.f32.mxu0 %v237
        %488 = vmatmul.mubr.f32.gmra.mrb[0].mxu0 %v236
        %v489 = vpop.f32.mrb[0].mxu0
        %v490 = vadd.f32 0.0, %v489
        %v491 = vpop.f32.mrb[0].mxu0
        %492 = vmatprep.mubr.f32.mxu0 %v239
        %493 = vmatmul.mubr.f32.gmra.mrb[0].mxu0 %v238
        %v494 = vpop.f32.mrb[0].mxu0
        %v495 = vadd.f32 0.0, %v494
        %v496 = vpop.f32.mrb[0].mxu0
        %497 = vmatprep.mubr.f32.mxu0 %v241
        %498 = vmatmul.mubr.f32.gmra.mrb[0].mxu0 %v240
        %v499 = vpop.f32.mrb[0].mxu0
        %v500 = vadd.f32 0.0, %v499
        %v501 = vpop.f32.mrb[0].mxu0
        %502 = vmatprep.mubr.f32.mxu0 %v243
        %503 = vmatmul.mubr.f32.gmra.mrb[0].mxu0 %v242
        %v504 = vpop.f32.mrb[0].mxu0
        %v505 = vadd.f32 0.0, %v504
        %v506 = vpop.f32.mrb[0].mxu0
        %507 = vmatprep.mubr.f32.mxu0 %v245
        %508 = vmatmul.mubr.f32.gmra.mrb[0].mxu0 %v244
        %v509 = vpop.f32.mrb[0].mxu0
        %v510 = vadd.f32 0.0, %v509
        %v511 = vpop.f32.mrb[0].mxu0
        %512 = vmatprep.mubr.f32.mxu0 %v247
        %513 = vmatmul.mubr.f32.gmra.mrb[0].mxu0 %v246
        %v514 = vpop.f32.mrb[0].mxu0
        %v515 = vadd.f32 0.0, %v514
        %v516 = vpop.f32.mrb[0].mxu0
        %517 = vmatprep.mubr.f32.mxu0 %v249
        %518 = vmatmul.mubr.f32.gmra.mrb[0].mxu0 %v248
        %v519 = vpop.f32.mrb[0].mxu0
        %v520 = vadd.f32 0.0, %v519
        %v521 = vpop.f32.mrb[0].mxu0
        %522 = vmatprep.mubr.f32.mxu0 %v251
        %523 = vmatmul.mubr.f32.gmra.mrb[0].mxu0 %v250
        %v524 = vpop.f32.mrb[0].mxu0
        %v525 = vadd.f32 0.0, %v524
        %v526 = vpop.f32.mrb[0].mxu0
        %527 = vmatprep.mubr.f32.mxu0 %v253
        %528 = vmatmul.mubr.f32.gmra.mrb[0].mxu0 %v252
        %v529 = vpop.f32.mrb[0].mxu0
        %v530 = vadd.f32 0.0, %v529
        %v531 = vpop.f32.mrb[0].mxu0
        %532 = vmatprep.mubr.f32.mxu0 %v255
        %533 = vmatmul.mubr.f32.gmra.mrb[0].mxu0 %v254
        %v534 = vpop.f32.mrb[0].mxu0
        %v535 = vadd.f32 0.0, %v534
        %v536 = vpop.f32.mrb[0].mxu0
        %537 = vmatprep.mubr.f32.mxu0 %v257
        %538 = vmatmul.mubr.f32.gmra.mrb[0].mxu0 %v256
        %v539 = vpop.f32.mrb[0].mxu0
        %v540 = vadd.f32 0.0, %v539
        %v541 = vpop.f32.mrb[0].mxu0
        %542 = vmatprep.mubr.f32.mxu0 %v259
        %543 = vmatmul.mubr.f32.gmra.mrb[0].mxu0 %v258
        %v544 = vpop.f32.mrb[0].mxu0
        %v545 = vadd.f32 0.0, %v544
        %v546 = vpop.f32.mrb[0].mxu0
        %547 = vmatprep.mubr.f32.mxu0 %v261
        %548 = vmatmul.mubr.f32.gmra.mrb[0].mxu0 %v260
        %v549 = vpop.f32.mrb[0].mxu0
        %v550 = vadd.f32 0.0, %v549
        %v551 = vpop.f32.mrb[0].mxu0
        %552 = vmatprep.mubr.f32.mxu0 %v263
        %553 = vmatmul.mubr.f32.gmra.mrb[0].mxu0 %v262
        %v554 = vpop.f32.mrb[0].mxu0
        %v555 = vadd.f32 0.0, %v554
        %v556 = vpop.f32.mrb[0].mxu0
        %557 = vmatprep.mubr.f32.mxu0 %v265
        %558 = vmatmul.mubr.f32.gmra.mrb[0].mxu0 %v264
        %v559 = vpop.f32.mrb[0].mxu0
        %v560 = vadd.f32 0.0, %v559
        %v561 = vpop.f32.mrb[0].mxu0
        %562 = vmatprep.mubr.f32.mxu0 %v267
        %563 = vmatmul.mubr.f32.gmra.mrb[0].mxu0 %v266
        %v564 = vpop.f32.mrb[0].mxu0
        %v565 = vadd.f32 0.0, %v564
        %v566 = vpop.f32.mrb[0].mxu0
        %567 = vmatprep.mubr.f32.mxu0 %v269
        %568 = vmatmul.mubr.f32.gmra.mrb[0].mxu0 %v268
        %v569 = vpop.f32.mrb[0].mxu0
        %v570 = vadd.f32 0.0, %v569
        %v571 = vpop.f32.mrb[0].mxu0
        %572 = vmatprep.mubr.f32.mxu0 %v271
        %573 = vmatmul.mubr.f32.gmra.mrb[0].mxu0 %v270
        %v574 = vpop.f32.mrb[0].mxu0
        %v575 = vadd.f32 0.0, %v574
        %v576 = vpop.f32.mrb[0].mxu0
        %577 = vmatprep.mubr.f32.mxu0 %v273
        %578 = vmatmul.mubr.f32.gmra.mrb[0].mxu0 %v272
        %v579 = vpop.f32.mrb[0].mxu0
        %v580 = vadd.f32 0.0, %v579
        %v581 = vpop.f32.mrb[0].mxu0
        %582 = vmatprep.mubr.f32.mxu0 %v275
        %583 = vmatmul.mubr.f32.gmra.mrb[0].mxu0 %v274
        %v584 = vpop.f32.mrb[0].mxu0
        %v585 = vadd.f32 0.0, %v584
        %v586 = vpop.f32.mrb[0].mxu0
        %587 = vmatprep.mubr.f32.mxu0 %v277
        %588 = vmatmul.mubr.f32.gmra.mrb[0].mxu0 %v276
        %v589 = vpop.f32.mrb[0].mxu0
        %v590 = vadd.f32 0.0, %v589
        %v591 = vpop.f32.mrb[0].mxu0
        %592 = vmatprep.mubr.f32.mxu0 %v279
        %593 = vmatmul.mubr.f32.gmra.mrb[0].mxu0 %v278
        %v594 = vpop.f32.mrb[0].mxu0
        %v595 = vadd.f32 0.0, %v594
        %v596 = vpop.f32.mrb[0].mxu0
        %597 = vmatprep.mubr.f32.mxu0 %v281
        %598 = vmatmul.mubr.f32.gmra.mrb[0].mxu0 %v280
        %v599 = vpop.f32.mrb[0].mxu0
        %v600 = vadd.f32 0.0, %v599
        %v601 = vpop.f32.mrb[0].mxu0
        %602 = vmatprep.mubr.f32.mxu0 %v283
        %603 = vmatmul.mubr.f32.gmra.mrb[0].mxu0 %v282
        %v604 = vpop.f32.mrb[0].mxu0
        %v605 = vadd.f32 0.0, %v604
        %v606 = vpop.f32.mrb[0].mxu0
        %607 = vmatprep.mubr.f32.mxu0 %v285
        %608 = vmatmul.mubr.f32.gmra.mrb[0].mxu0 %v284
        %v609 = vpop.f32.mrb[0].mxu0
        %v610 = vadd.f32 0.0, %v609
        %v611 = vpop.f32.mrb[0].mxu0
        %612 = vmatprep.mubr.f32.mxu0 %v287
        %613 = vmatmul.mubr.f32.gmra.mrb[0].mxu0 %v286
        %v614 = vpop.f32.mrb[0].mxu0
        %v615 = vadd.f32 0.0, %v614
        %v616 = vpop.f32.mrb[0].mxu0
        %617 = vmatprep.mubr.f32.mxu0 %v289
        %618 = vmatmul.mubr.f32.gmra.mrb[0].mxu0 %v288
        %v619 = vpop.f32.mrb[0].mxu0
        %v620 = vadd.f32 0.0, %v619
        %v621 = vpop.f32.mrb[0].mxu0
        %622 = vmatprep.mubr.f32.mxu0 %v291
        %623 = vmatmul.mubr.f32.gmra.mrb[0].mxu0 %v290
        %v624 = vpop.f32.mrb[0].mxu0
        %v625 = vadd.f32 0.0, %v624
        %v626 = vpop.f32.mrb[0].mxu0
        %627 = vmatprep.mubr.f32.mxu0 %v293
        %628 = vmatmul.mubr.f32.gmra.mrb[0].mxu0 %v292
        %v629 = vpop.f32.mrb[0].mxu0
        %v630 = vadd.f32 0.0, %v629
        %v631 = vpop.f32.mrb[0].mxu0
        %632 = vmatprep.mubr.f32.mxu0 %v295
        %633 = vmatmul.mubr.f32.gmra.mrb[0].mxu0 %v294
        %v634 = vpop.f32.mrb[0].mxu0
        %v635 = vadd.f32 0.0, %v634
        %v636 = vpop.f32.mrb[0].mxu0
        %637 = vmatprep.mubr.f32.mxu0 %v297
        %638 = vmatmul.mubr.f32.gmra.mrb[0].mxu0 %v296
        %v639 = vpop.f32.mrb[0].mxu0
        %v640 = vadd.f32 0.0, %v639
        %v641 = vpop.f32.mrb[0].mxu0
        %642 = vmatprep.mubr.f32.mxu0 %v299
        %643 = vmatmul.mubr.f32.gmra.mrb[0].mxu0 %v298
        %v644 = vpop.f32.mrb[0].mxu0
        %v645 = vadd.f32 0.0, %v644
        %v646 = vpop.f32.mrb[0].mxu0
        %647 = vmatprep.mubr.f32.mxu0 %v301
        %648 = vmatmul.mubr.f32.gmra.mrb[0].mxu0 %v300
        %v649 = vpop.f32.mrb[0].mxu0
        %v650 = vadd.f32 0.0, %v649
        %v651 = vpop.f32.mrb[0].mxu0
        %652 = vmatprep.mubr.f32.mxu0 %v303
        %653 = vmatmul.mubr.f32.gmra.mrb[0].mxu0 %v302
        %v654 = vpop.f32.mrb[0].mxu0
        %v655 = vadd.f32 0.0, %v654
        %v656 = vpop.f32.mrb[0].mxu0
        %657 = vmatprep.mubr.f32.mxu0 %v305
        %658 = vmatmul.mubr.f32.gmra.mrb[0].mxu0 %v304
        %v659 = vpop.f32.mrb[0].mxu0
        %v660 = vadd.f32 0.0, %v659
        %v661 = vpop.f32.mrb[0].mxu0
        %662 = vmatprep.mubr.f32.mxu0 %v307
        %663 = vmatmul.mubr.f32.gmra.mrb[0].mxu0 %v306
        %v664 = vpop.f32.mrb[0].mxu0
        %v665 = vadd.f32 0.0, %v664
        %v666 = vpop.f32.mrb[0].mxu0
        %667 = vmatprep.mubr.f32.mxu0 %v309
        %668 = vmatmul.mubr.f32.gmra.mrb[0].mxu0 %v308
        %v669 = vpop.f32.mrb[0].mxu0
        %v670 = vadd.f32 0.0, %v669
        %v671 = vpop.f32.mrb[0].mxu0
        %672 = vmatprep.mubr.f32.mxu0 %v311
        %673 = vmatmul.mubr.f32.gmra.mrb[0].mxu0 %v310
        %v674 = vpop.f32.mrb[0].mxu0
        %v675 = vadd.f32 0.0, %v674
        %v676 = vpop.f32.mrb[0].mxu0
        %677 = vmatprep.mubr.f32.mxu0 %v313
        %678 = vmatmul.mubr.f32.gmra.mrb[0].mxu0 %v312
        %v679 = vpop.f32.mrb[0].mxu0
        %v680 = vadd.f32 0.0, %v679
        %v681 = vpop.f32.mrb[0].mxu0
        %682 = vmatprep.mubr.f32.mxu0 %v315
        %683 = vmatmul.mubr.f32.gmra.mrb[0].mxu0 %v314
        %v684 = vpop.f32.mrb[0].mxu0
        %v685 = vadd.f32 0.0, %v684
        %v686 = vpop.f32.mrb[0].mxu0
        %687 = vmatprep.mubr.f32.mxu0 %v317
        %688 = vmatmul.mubr.f32.gmra.mrb[0].mxu0 %v316
        %v689 = vpop.f32.mrb[0].mxu0
        %v690 = vadd.f32 0.0, %v689
        %v691 = vpop.f32.mrb[0].mxu0
        %692 = vmatprep.mubr.f32.mxu0 %v319
        %693 = vmatmul.mubr.f32.gmra.mrb[0].mxu0 %v318
        %v694 = vpop.f32.mrb[0].mxu0
        %v695 = vadd.f32 0.0, %v694
        %v696 = vpop.f32.mrb[0].mxu0
        %697 = vmatprep.mubr.f32.mxu0 %v321
        %698 = vmatmul.mubr.f32.gmra.mrb[0].mxu0 %v320
        %v699 = vpop.f32.mrb[0].mxu0
        %v700 = vadd.f32 0.0, %v699
        %v701 = vpop.f32.mrb[0].mxu0
        %702 = vmatprep.mubr.f32.mxu0 %v323
        %703 = vmatmul.mubr.f32.gmra.mrb[0].mxu0 %v322
        %v704 = vpop.f32.mrb[0].mxu0
        %v705 = vadd.f32 0.0, %v704
        %v706 = vpop.f32.mrb[0].mxu0
        %707 = vmatprep.mubr.f32.mxu0 %v325
        %708 = vmatmul.mubr.f32.gmra.mrb[0].mxu0 %v324
        %v709 = vpop.f32.mrb[0].mxu0
        %v710 = vadd.f32 0.0, %v709
        %v711 = vpop.f32.mrb[0].mxu0
        %712 = vmatprep.mubr.f32.mxu0 %v327
        %713 = vmatmul.mubr.f32.gmra.mrb[0].mxu0 %v326
        %v714 = vpop.f32.mrb[0].mxu0
        %v715 = vadd.f32 0.0, %v714
        %v716 = vpop.f32.mrb[0].mxu0
        %717 = vmatprep.mubr.f32.mxu0 %v329
        %718 = vmatmul.mubr.f32.gmra.mrb[0].mxu0 %v328
        %v719 = vpop.f32.mrb[0].mxu0
        %v720 = vadd.f32 0.0, %v719
        %v721 = vpop.f32.mrb[0].mxu0
        %722 = vmatprep.mubr.f32.mxu0 %v331
        %723 = vmatmul.mubr.f32.gmra.mrb[0].mxu0 %v330
        %v724 = vpop.f32.mrb[0].mxu0
        %v725 = vadd.f32 0.0, %v724
        %v726 = vpop.f32.mrb[0].mxu0
        %727 = vmatprep.mubr.f32.mxu0 %v333
        %728 = vmatmul.mubr.f32.gmra.mrb[0].mxu0 %v332
        %v729 = vpop.f32.mrb[0].mxu0
        %v730 = vadd.f32 0.0, %v729
        %v731 = vpop.f32.mrb[0].mxu0
        %732 = vmatprep.mubr.f32.mxu0 %v335
        %733 = vmatmul.mubr.f32.gmra.mrb[0].mxu0 %v334
        %v734 = vpop.f32.mrb[0].mxu0
        %v735 = vadd.f32 0.0, %v734
        %v736 = vpop.f32.mrb[0].mxu0
        %737 = vmatprep.mubr.f32.mxu0 %v337
        %738 = vmatmul.mubr.f32.gmra.mrb[0].mxu0 %v336
        %v739 = vpop.f32.mrb[0].mxu0
        %v740 = vadd.f32 0.0, %v739
        %v741 = vpop.f32.mrb[0].mxu0
        %742 = vmatprep.mubr.f32.mxu0 %v339
        %743 = vmatmul.mubr.f32.gmra.mrb[0].mxu0 %v338
        %v744 = vpop.f32.mrb[0].mxu0
        %v745 = vadd.f32 0.0, %v744
        %v746 = vpop.f32.mrb[0].mxu0
        %747 = vmatprep.mubr.f32.mxu0 %v341
        %748 = vmatmul.mubr.f32.gmra.mrb[0].mxu0 %v340
        %v749 = vpop.f32.mrb[0].mxu0
        %v750 = vadd.f32 0.0, %v749
        %v751 = vpop.f32.mrb[0].mxu0
        %752 = vmatprep.mubr.f32.mxu0 %v343
        %753 = vmatmul.mubr.f32.gmra.mrb[0].mxu0 %v342
        %v754 = vpop.f32.mrb[0].mxu0
        %v755 = vadd.f32 0.0, %v754
        %v756 = vpop.f32.mrb[0].mxu0
        %757 = vmatprep.mubr.f32.mxu0 %v345
        %758 = vmatmul.mubr.f32.gmra.mrb[0].mxu0 %v344
        %v759 = vpop.f32.mrb[0].mxu0
        %v760 = vadd.f32 0.0, %v759
        %v761 = vpop.f32.mrb[0].mxu0
        %762 = vdwg.mxu0
        %763 = vxpose.xlu0.b32.start [1/16] %v445, 128
        %764 = vxpose.xlu0.b32.cont [2/16] %v450, 128
        %765 = vxpose.xlu0.b32.cont [3/16] %v455, 128
        %766 = vxpose.xlu0.b32.cont [4/16] %v460, 128
        %767 = vxpose.xlu0.b32.cont [5/16] %v465, 128
        %768 = vxpose.xlu0.b32.cont [6/16] %v470, 128
        %769 = vxpose.xlu0.b32.cont [7/16] %v475, 128
        %770 = vxpose.xlu0.b32.cont [8/16] %v480, 128
        %771 = vxpose.xlu0.b32.cont [9/16] %v485, 128
        %772 = vxpose.xlu0.b32.cont [10/16] %v490, 128
        %773 = vxpose.xlu0.b32.cont [11/16] %v495, 128
        %774 = vxpose.xlu0.b32.cont [12/16] %v500, 128
        %775 = vxpose.xlu0.b32.cont [13/16] %v505, 128
        %776 = vxpose.xlu0.b32.cont [14/16] %v510, 128
        %777 = vxpose.xlu0.b32.cont [15/16] %v515, 128
        %778 = vxpose.xlu0.b32.end [16/16] %v520, 128
        %v779 = vpop.trf.xlu0
        %v780 = vpop.trf.xlu0
        %v781 = vpop.trf.xlu0
        %v782 = vpop.trf.xlu0
        %v783 = vpop.trf.xlu0
        %v784 = vpop.trf.xlu0
        %v785 = vpop.trf.xlu0
        %v786 = vpop.trf.xlu0
        %v787 = vpop.trf.xlu0
        %v788 = vpop.trf.xlu0
        %v789 = vpop.trf.xlu0
        %v790 = vpop.trf.xlu0
        %v791 = vpop.trf.xlu0
        %v792 = vpop.trf.xlu0
        %v793 = vpop.trf.xlu0
        %v794 = vpop.trf.xlu0
        %795 = vxpose.xlu0.b32.start [1/16] %v525, 128
        %796 = vxpose.xlu0.b32.cont [2/16] %v530, 128
        %797 = vxpose.xlu0.b32.cont [3/16] %v535, 128
        %798 = vxpose.xlu0.b32.cont [4/16] %v540, 128
        %799 = vxpose.xlu0.b32.cont [5/16] %v545, 128
        %800 = vxpose.xlu0.b32.cont [6/16] %v550, 128
        %801 = vxpose.xlu0.b32.cont [7/16] %v555, 128
        %802 = vxpose.xlu0.b32.cont [8/16] %v560, 128
        %803 = vxpose.xlu0.b32.cont [9/16] %v565, 128
        %804 = vxpose.xlu0.b32.cont [10/16] %v570, 128
        %805 = vxpose.xlu0.b32.cont [11/16] %v575, 128
        %806 = vxpose.xlu0.b32.cont [12/16] %v580, 128
        %807 = vxpose.xlu0.b32.cont [13/16] %v585, 128
        %808 = vxpose.xlu0.b32.cont [14/16] %v590, 128
        %809 = vxpose.xlu0.b32.cont [15/16] %v595, 128
        %810 = vxpose.xlu0.b32.end [16/16] %v600, 128
        %v811 = vpop.trf.xlu0
        %v812 = vpop.trf.xlu0
        %v813 = vpop.trf.xlu0
        %v814 = vpop.trf.xlu0
        %v815 = vpop.trf.xlu0
        %v816 = vpop.trf.xlu0
        %v817 = vpop.trf.xlu0
        %v818 = vpop.trf.xlu0
        %v819 = vpop.trf.xlu0
        %v820 = vpop.trf.xlu0
        %v821 = vpop.trf.xlu0
        %v822 = vpop.trf.xlu0
        %v823 = vpop.trf.xlu0
        %v824 = vpop.trf.xlu0
        %v825 = vpop.trf.xlu0
        %v826 = vpop.trf.xlu0
        %827 = vxpose.xlu0.b32.start [1/16] %v605, 128
        %828 = vxpose.xlu0.b32.cont [2/16] %v610, 128
        %829 = vxpose.xlu0.b32.cont [3/16] %v615, 128
        %830 = vxpose.xlu0.b32.cont [4/16] %v620, 128
        %831 = vxpose.xlu0.b32.cont [5/16] %v625, 128
        %832 = vxpose.xlu0.b32.cont [6/16] %v630, 128
        %833 = vxpose.xlu0.b32.cont [7/16] %v635, 128
        %834 = vxpose.xlu0.b32.cont [8/16] %v640, 128
        %835 = vxpose.xlu0.b32.cont [9/16] %v645, 128
        %836 = vxpose.xlu0.b32.cont [10/16] %v650, 128
        %837 = vxpose.xlu0.b32.cont [11/16] %v655, 128
        %838 = vxpose.xlu0.b32.cont [12/16] %v660, 128
        %839 = vxpose.xlu0.b32.cont [13/16] %v665, 128
        %840 = vxpose.xlu0.b32.cont [14/16] %v670, 128
        %841 = vxpose.xlu0.b32.cont [15/16] %v675, 128
        %842 = vxpose.xlu0.b32.end [16/16] %v680, 128
        %v843 = vpop.trf.xlu0
        %v844 = vpop.trf.xlu0
        %v845 = vpop.trf.xlu0
        %v846 = vpop.trf.xlu0
        %v847 = vpop.trf.xlu0
        %v848 = vpop.trf.xlu0
        %v849 = vpop.trf.xlu0
        %v850 = vpop.trf.xlu0
        %v851 = vpop.trf.xlu0
        %v852 = vpop.trf.xlu0
        %v853 = vpop.trf.xlu0
        %v854 = vpop.trf.xlu0
        %v855 = vpop.trf.xlu0
        %v856 = vpop.trf.xlu0
        %v857 = vpop.trf.xlu0
        %v858 = vpop.trf.xlu0
        %859 = vxpose.xlu0.b32.start [1/16] %v685, 128
        %860 = vxpose.xlu0.b32.cont [2/16] %v690, 128
        %861 = vxpose.xlu0.b32.cont [3/16] %v695, 128
        %862 = vxpose.xlu0.b32.cont [4/16] %v700, 128
        %863 = vxpose.xlu0.b32.cont [5/16] %v705, 128
        %864 = vxpose.xlu0.b32.cont [6/16] %v710, 128
        %865 = vxpose.xlu0.b32.cont [7/16] %v715, 128
        %866 = vxpose.xlu0.b32.cont [8/16] %v720, 128
        %867 = vxpose.xlu0.b32.cont [9/16] %v725, 128
        %868 = vxpose.xlu0.b32.cont [10/16] %v730, 128
        %869 = vxpose.xlu0.b32.cont [11/16] %v735, 128
        %870 = vxpose.xlu0.b32.cont [12/16] %v740, 128
        %871 = vxpose.xlu0.b32.cont [13/16] %v745, 128
        %872 = vxpose.xlu0.b32.cont [14/16] %v750, 128
        %873 = vxpose.xlu0.b32.cont [15/16] %v755, 128
        %874 = vxpose.xlu0.b32.end [16/16] %v760, 128
        %v875 = vpop.trf.xlu0
        %v876 = vpop.trf.xlu0
        %v877 = vpop.trf.xlu0
        %v878 = vpop.trf.xlu0
        %v879 = vpop.trf.xlu0
        %v880 = vpop.trf.xlu0
        %v881 = vpop.trf.xlu0
        %v882 = vpop.trf.xlu0
        %v883 = vpop.trf.xlu0
        %v884 = vpop.trf.xlu0
        %v885 = vpop.trf.xlu0
        %v886 = vpop.trf.xlu0
        %v887 = vpop.trf.xlu0
        %v888 = vpop.trf.xlu0
        %v889 = vpop.trf.xlu0
        %v890 = vpop.trf.xlu0
        %v895 = vcombine.low %v779, %v811
        %v896 = vcombine.low %v843, %v875
        %v897 = vld [vmem:[%s2] sm:$0xff]
        %v898 = vld [vmem:[%s2 + $0x8] sm:$0xff]
        %v899 = vld [vmem:[%s2 + $0x10] sm:$0xff]
        %v900 = vld [vmem:[%s2 + $0x18] sm:$0xff]
        %v901 = vld [vmem:[%s2 + $0x20] sm:$0xff]
        %v902 = vld [vmem:[%s2 + $0x28] sm:$0xff]
        %v903 = vld [vmem:[%s2 + $0x30] sm:$0xff]
        %v904 = vld [vmem:[%s2 + $0x38] sm:$0xff]
        %v905 = vld [vmem:[%s2 + $0x40] sm:$0xff]
        %v906 = vld [vmem:[%s2 + $0x48] sm:$0xff]
        %v907 = vld [vmem:[%s2 + $0x50] sm:$0xff]
        %v908 = vld [vmem:[%s2 + $0x58] sm:$0xff]
        %v909 = vld [vmem:[%s2 + $0x60] sm:$0xff]
        %v910 = vld [vmem:[%s2 + $0x68] sm:$0xff]
        %v911 = vld [vmem:[%s2 + $0x70] sm:$0xff]
        %v912 = vld [vmem:[%s2 + $0x78] sm:$0xff]
        %v913 = vld [vmem:[%s2 + $0x80] sm:$0xff]
        %v914 = vld [vmem:[%s2 + $0x88] sm:$0xff]
        %v915 = vld [vmem:[%s2 + $0x90] sm:$0xff]
        %v916 = vld [vmem:[%s2 + $0x98] sm:$0xff]
        %v917 = vld [vmem:[%s2 + $0xa0] sm:$0xff]
        %v918 = vld [vmem:[%s2 + $0xa8] sm:$0xff]
        %v919 = vld [vmem:[%s2 + $0xb0] sm:$0xff]
        %v920 = vld [vmem:[%s2 + $0xb8] sm:$0xff]
        %v921 = vld [vmem:[%s2 + $0xc0] sm:$0xff]
        %v922 = vld [vmem:[%s2 + $0xc8] sm:$0xff]
        %v923 = vld [vmem:[%s2 + $0xd0] sm:$0xff]
        %v924 = vld [vmem:[%s2 + $0xd8] sm:$0xff]
        %v925 = vld [vmem:[%s2 + $0xe0] sm:$0xff]
        %v926 = vld [vmem:[%s2 + $0xe8] sm:$0xff]
        %v927 = vld [vmem:[%s2 + $0xf0] sm:$0xff]
        %v928 = vld [vmem:[%s2 + $0xf8] sm:$0xff]
        %v929 = vld [vmem:[%s3] sm:$0x1]
        %v931 = vlaneseq
        %v932 = vshrl.u32 %v931, 7
        %v933 = vsub.s32 0, %v932
        %v934 = vrot.slane %v929, %v933
        %v936 = vcombine.low %v895, %v896
        %v937 = vcombine.high %v895, %v896
        %940 = vmatprep.subr.mxu0 0.0
        %941 = vmatpush1.msra.mxu0 %v897
        %942 = vmatprep.subr.mxu0 0.0
        %943 = vmatpush1.msra.mxu0 %v898
        %944 = vmatprep.subr.mxu0 0.0
        %945 = vmatpush1.msra.mxu0 %v899
        %946 = vmatprep.subr.mxu0 0.0
        %947 = vmatpush1.msra.mxu0 %v900
        %948 = vmatprep.subr.mxu0 0.0
        %949 = vmatpush1.msra.mxu0 %v901
        %950 = vmatprep.subr.mxu0 0.0
        %951 = vmatpush1.msra.mxu0 %v902
        %952 = vmatprep.subr.mxu0 0.0
        %953 = vmatpush1.msra.mxu0 %v903
        %954 = vmatprep.subr.mxu0 0.0
        %955 = vmatpush1.msra.mxu0 %v904
        %956 = vmatprep.subr.mxu0 0.0
        %957 = vmatpush1.msra.mxu0 %v905
        %958 = vmatprep.subr.mxu0 0.0
        %959 = vmatpush1.msra.mxu0 %v906
        %960 = vmatprep.subr.mxu0 0.0
        %961 = vmatpush1.msra.mxu0 %v907
        %962 = vmatprep.subr.mxu0 0.0
        %963 = vmatpush1.msra.mxu0 %v908
        %964 = vmatprep.subr.mxu0 0.0
        %965 = vmatpush1.msra.mxu0 %v909
        %966 = vmatprep.subr.mxu0 0.0
        %967 = vmatpush1.msra.mxu0 %v910
        %968 = vmatprep.subr.mxu0 0.0
        %969 = vmatpush1.msra.mxu0 %v911
        %970 = vmatprep.subr.mxu0 0.0
        %971 = vmatpush1.msra.mxu0 %v912
        %972 = vmatprep.subr.mxu0 0.0
        %973 = vmatpush1.msra.mxu0 %v913
        %974 = vmatprep.subr.mxu0 0.0
        %975 = vmatpush1.msra.mxu0 %v914
        %976 = vmatprep.subr.mxu0 0.0
        %977 = vmatpush1.msra.mxu0 %v915
        %978 = vmatprep.subr.mxu0 0.0
        %979 = vmatpush1.msra.mxu0 %v916
        %980 = vmatprep.subr.mxu0 0.0
        %981 = vmatpush1.msra.mxu0 %v917
        %982 = vmatprep.subr.mxu0 0.0
        %983 = vmatpush1.msra.mxu0 %v918
        %984 = vmatprep.subr.mxu0 0.0
        %985 = vmatpush1.msra.mxu0 %v919
        %986 = vmatprep.subr.mxu0 0.0
        %987 = vmatpush1.msra.mxu0 %v920
        %988 = vmatprep.subr.mxu0 0.0
        %989 = vmatpush1.msra.mxu0 %v921
        %990 = vmatprep.subr.mxu0 0.0
        %991 = vmatpush1.msra.mxu0 %v922
        %992 = vmatprep.subr.mxu0 0.0
        %993 = vmatpush1.msra.mxu0 %v923
        %994 = vmatprep.subr.mxu0 0.0
        %995 = vmatpush1.msra.mxu0 %v924
        %996 = vmatprep.subr.mxu0 0.0
        %997 = vmatpush1.msra.mxu0 %v925
        %998 = vmatprep.subr.mxu0 0.0
        %999 = vmatpush1.msra.mxu0 %v926
        %1000 = vmatprep.subr.mxu0 0.0
        %1001 = vmatpush1.msra.mxu0 %v927
        %1002 = vmatprep.subr.mxu0 0.0
        %1003 = vmatpush1.msra.mxu0 %v928
        %1004 = vmatprep.mubr.f32.mxu0 %v937
        %1005 = vmatmul.mubr.f32.gmra.mrb[0].mxu0 %v936
        %v1006 = vpop.f32.mrb[0].mxu0
        %v1007 = vadd.f32 %v934, %v1006
        %v1008 = vpop.f32.mrb[0].mxu0
        %1009 = vdwg.mxu0
        %v1010 = vmax.f32 %v1007, 0.0
        %1011 = vst [vmem:[%s216] sm:$0xff] %v1010
        %s1012 = sand.u32 %s118, 1
        %s1013 = scalar_lea.sflag [#allocation4], %s1012
        %s1014 = sand.u32 %s118, 1
        %s1015 = smul.addr %s1014, 8
        %s1016 = scalar_lea.vmem [#allocation5], %s1015
        // Predicated region
        $region41: #{tpu_custom_call.1} parent=35 // pred_check
          %p1017 = pneg %p128
        $region42: #{tpu_custom_call.1} parent=35 // pred_check_branch
          %1019 = sbr.rel (%p1017) target = $region44
        $region43: #{tpu_custom_call.1} parent=35 // pred_region
          %s1021 = ssub.s32 128, 128
          %1022 = vsyncadd %s1013, %s1021
          %s1023 = smul.addr %s21, 128
          %s1024 = scalar_lea.hbm %s4, %s1023
          %s1026 = sshll.u32 %s1016, 4
          %s1027 = int_to_ptr.vmem [resolvable:$true] %s1026
          %1029 = dma.vmem_to_hbm [thread:$0]  %s1027, 128, %s1024, %s1013
        $region44: #{tpu_custom_call.1} parent=35 // pred_fallthru
          _
      $region36: #{tpu_custom_call.1} parent=5 // pred_fallthru
        _
      %p1030 = scmp.le.s32.totalorder 2, %s16
      // Predicated region
      $region45: #{tpu_custom_call.1} parent=5 // pred_check
        %p1031 = pneg %p1030
      $region46: #{tpu_custom_call.1} parent=5 // pred_check_branch
        %1033 = sbr.rel (%p1031) target = $region48
      $region47: #{tpu_custom_call.1} parent=5 // pred_region
        %s1034 = ssub.s32 %s16, 2
        // Predicated region
        $region49: #{tpu_custom_call.1} parent=47 // pred_check
          %p1035 = pneg %p134
        $region50: #{tpu_custom_call.1} parent=47 // pred_check_branch
          %1037 = sbr.rel (%p1035) target = $region52
        $region51: #{tpu_custom_call.1} parent=47 // pred_region
          %s1038 = sand.u32 %s119, 1
          %s1039 = scalar_lea.sflag [#allocation4], %s1038
          %s1040 = sand.u32 %s119, 1
          %s1041 = smul.addr %s1040, 8
          %s1042 = scalar_lea.vmem [#allocation5], %s1041
          %1043 = dma.done %s1039, 128
        $region52: #{tpu_custom_call.1} parent=47 // pred_fallthru
          _
      $region48: #{tpu_custom_call.1} parent=5 // pred_fallthru
        _
    $region6: #{tpu_custom_call.1} parent=1 // loop_footer
      %s20 = sadd.s32 1, %s16
    $region7: #{tpu_custom_call.1} parent=1 // loop_footer_branch
      %15 = sbr.rel target = $region3
    $region8: #{tpu_custom_call.1} parent=1 // loop_exit
      _
    %1044 = vsyncpa [#allocation3], 1
    %s1045 = scalar_lea.sflag [#allocation3], 1
    %1046 = vsyncpa %s1045, 1
    %1047 = vsyncpa [#allocation4], 1
    %s1048 = scalar_lea.sflag [#allocation4], 1
    %1049 = vsyncpa %s1048, 1

</llo_original>
